<compile_context>
chip_gen: v6e
topology: v6e:2x2x1
jax: 0.10.0
libtpu: 0.0.40
codegen_flags: <defaults>
</compile_context>

<pallas_src>
import math

import jax
import jax.numpy as jnp
import numpy as np
from jax.experimental import pallas as pl
from jax.experimental.pallas import tpu as pltpu


def _drop_path_kernel(scale_ref, x_ref, o_ref):
    # scale_ref: (TB, 1) per-row scale (0 for dropped rows, 1/keep_prob for kept).
    # x_ref / o_ref: (TB, TILE_F) tile.  Pure elementwise multiply with a
    # lane-broadcast, in the input's native dtype.
    o_ref[...] = x_ref[...] * scale_ref[...]


def _block_budget():
    """Generation-aware (target block bytes, vmem_limit_bytes or None)."""
    kind = ""
    try:
        kind = jax.devices()[0].device_kind.lower()
    except Exception:
        pass
    if "v7" in kind:
        # 8 MiB blocks: pipeline footprint (in+out, double buffered) ~32 MiB,
        # which exceeds the 32 MiB default scoped limit but fits 64 MiB VMEM.
        return 8 << 20, 48 << 20
    if "v6" in kind:
        return 4 << 20, None   # ~16 MiB footprint < 32 MiB default scoped VMEM
    # v5e / unknown: stay under the 16 MiB default scoped limit.
    return 2 << 20, None


def _pick_lane_tile(cols, itemsize, target_bytes):
    """Lane (last-dim) tile: multiple of 128 that divides cols when possible."""
    cap = max(128, (target_bytes // (8 * itemsize)) // 128 * 128)
    if cols <= cap:
        return cols                      # full extent is always a legal block dim
    if cols % 128 == 0:
        cand = cap
        while cand >= 128:               # largest 128-multiple <= cap dividing cols
            if cols % cand == 0:
                return cand
            cand -= 128
    return cap                           # 128-multiple; trailing block is masked


def _pick_row_tile(rows, tile_f, itemsize, target_bytes):
    """Row (sublane) tile: multiple of 8 (or full extent), sized to the budget."""
    max_tb = max(8, (target_bytes // max(1, tile_f * itemsize)) // 8 * 8)
    if rows <= max_tb:
        return rows
    return max_tb


def drop_path(x, drop_prob: float = 0.0, training: bool = False, *,
              key=None, seed: int = 0, use_pallas=None, block_bytes=None):
    """JAX/Pallas equivalent of PyTorch DropPath.forward.

    Pass a fresh `key` (preferred) or a per-step `seed`; otherwise the mask is a
    static function of `seed`.  `use_pallas=None` auto-selects (plain multiply
    for tiny tensors); True/False forces the choice.  `block_bytes` overrides the
    generation-aware block-size heuristic (mainly for testing).
    """
    if drop_prob == 0.0 or not training:
        return x  # identity path, same as PyTorch

    orig_shape = x.shape
    B = int(orig_shape[0])
    feat = int(np.prod(orig_shape[1:])) if x.ndim > 1 else 1
    keep_prob = 1.0 - float(drop_prob)

    # Per-sample keep decision, computed once outside the bandwidth-bound kernel.
    # floor(keep_prob + u) == 1  iff  u >= drop_prob; fold 1/keep_prob in now.
    if key is None:
        key = jax.random.PRNGKey(seed)
    u = jax.random.uniform(key, (B, 1), dtype=jnp.float32)
    keep = (u >= jnp.float32(drop_prob)).astype(jnp.float32)
    scale = (keep * np.float32(1.0 / keep_prob)).astype(x.dtype)      # (B, 1)

    itemsize = jnp.dtype(x.dtype).itemsize
    total_bytes = B * feat * itemsize

    # Tiny activations: the fused XLA multiply is already at roofline; skip the
    # pallas_call / grid fixed overhead.
    if use_pallas is None:
        use_pallas = total_bytes >= (1 << 20)
    if not use_pallas:
        return x * scale.reshape((B,) + (1,) * (x.ndim - 1))

    # Sublane fill: when B is not a multiple of 8, fold a factor G of the feature
    # axis into the row axis so vregs/DMAs are sublane-dense (v7x-critical).
    rows, cols = B, feat
    row_scale = scale
    if B % 8 != 0:
        G = 8 // math.gcd(B, 8)
        if G > 1 and feat % G == 0 and (feat // G) % 128 == 0:
            rows, cols = B * G, feat // G
            row_scale = jnp.repeat(scale, G, axis=0)                  # (rows, 1)

    if block_bytes is None:
        block_bytes, vmem_limit = _block_budget()
    else:
        vmem_limit = None

    tile_f = _pick_lane_tile(cols, itemsize, block_bytes)
    tb = _pick_row_tile(rows, tile_f, itemsize, block_bytes)

    # Megacore: avoid a single-point grid for non-trivial tensors so both v7x
    # TensorCores stream (harmless on single-TC v5e/v6e).  Only split in ways
    # that keep block dims legal (128-multiples / 8-multiples).
    if tb == rows and tile_f == cols and total_bytes > (1 << 20):
        if cols % 512 == 0:
            tile_f = cols // 4
        elif cols % 256 == 0:
            tile_f = cols // 2
        elif rows % 16 == 0:
            tb = rows // 2

    x2 = x.reshape(rows, cols)
    grid = (pl.cdiv(rows, tb), pl.cdiv(cols, tile_f))

    cp_kwargs = dict(dimension_semantics=("parallel", "parallel"))
    if vmem_limit is not None:
        cp_kwargs["vmem_limit_bytes"] = int(vmem_limit)

    y2 = pl.pallas_call(
        _drop_path_kernel,
        out_shape=jax.ShapeDtypeStruct((rows, cols), x.dtype),
        grid=grid,
        in_specs=[
            pl.BlockSpec((tb, 1), lambda i, j: (i, 0)),        # per-row scales
            pl.BlockSpec((tb, tile_f), lambda i, j: (i, j)),   # x tile
        ],
        out_specs=pl.BlockSpec((tb, tile_f), lambda i, j: (i, j)),
        compiler_params=pltpu.CompilerParams(**cp_kwargs),
        cost_estimate=pl.CostEstimate(
            flops=rows * cols,
            transcendentals=0,
            bytes_accessed=2 * rows * cols * itemsize + rows * itemsize,
        ),
    )(row_scale, x2)

    return y2.reshape(orig_shape)


def _check_rows(y_np, x_np, keep_prob):
    """Each batch row must be all-zero (dropped) or exactly x / keep_prob (kept)."""
    for b in range(x_np.shape[0]):
        row = y_np[b]
        is_dropped = np.allclose(row, 0.0)
        is_kept = np.allclose(row, x_np[b] / keep_prob, rtol=1e-5, atol=1e-5)
        assert is_dropped or is_kept, f"batch {b}: invalid DropPath output"


if __name__ == "__main__":
    # --- Test 1: small shape consistent with the module (forces the Pallas path,
    #     exercises the B<8 sublane-fill fold: (2,1024) -> (8,256)). -------------
    B, C, H, W = 2, 4, 16, 16
    key = jax.random.PRNGKey(0)
    kx, kmask1, kmask2 = jax.random.split(key, 3)
    x = jax.random.normal(kx, (B, C, H, W), dtype=jnp.float32)

    drop_prob = 0.25
    keep_prob = 1.0 - drop_prob

    y = drop_path(x, drop_prob=drop_prob, training=True, key=kmask1, use_pallas=True)
    y = jax.block_until_ready(y)
    _check_rows(np.asarray(y), np.asarray(x), keep_prob)

    # --- Test 2: larger batch + small forced block size to exercise the 2-D
    #     (row, feature) tiled grid (multiple blocks on both axes). -------------
    x_big = jax.random.normal(kx, (16, 8, 32, 32), dtype=jnp.float32)
    y_big = drop_path(x_big, drop_prob=0.3, training=True, key=kmask2,
                      use_pallas=True, block_bytes=64 * 1024)
    y_big = jax.block_until_ready(y_big)
    _check_rows(np.asarray(y_big), np.asarray(x_big), 1.0 - 0.3)

    # --- Test 3: eval / drop_prob==0 paths must be identity. -------------------
    x_np = np.asarray(x)
    y_eval = jax.block_until_ready(drop_path(x, drop_prob=drop_prob, training=False))
    assert np.allclose(np.asarray(y_eval), x_np)
    y_zero = jax.block_until_ready(drop_path(x, drop_prob=0.0, training=True))
    assert np.allclose(np.asarray(y_zero), x_np)

    print("KERNEL_OK")
</pallas_src>

<mosaic_0001>
module attributes {stable_mosaic.version = 11 : i64} {
  func.func @_drop_path_kernel(%arg0: i32, %arg1: i32, %arg2: memref<8x1xf32, #tpu.memory_space<vmem>>, %arg3: memref<8x256xf32, #tpu.memory_space<vmem>>, %arg4: memref<8x256xf32, #tpu.memory_space<vmem>>) attributes {dimension_semantics = [#tpu.dimension_semantics<parallel>, #tpu.dimension_semantics<parallel>], iteration_bounds = array<i64: 1, 1>, scalar_prefetch = 0 : i64, scratch_operands = 0 : i64, tpu.core_type = #tpu.core_type<tc>, window_params = [{transform_indices = @transform_0, window_bounds = array<i64: 8, 1>}, {transform_indices = @transform_1, window_bounds = array<i64: 8, 256>}, {transform_indices = @transform_2, window_bounds = array<i64: 8, 256>}]} {
    %c0 = arith.constant 0 : index
    %c0_0 = arith.constant 0 : index
    %0 = vector.load %arg3[%c0, %c0_0] : memref<8x256xf32, #tpu.memory_space<vmem>>, vector<8x256xf32>
    %c0_1 = arith.constant 0 : index
    %c0_2 = arith.constant 0 : index
    %1 = vector.load %arg2[%c0_1, %c0_2] : memref<8x1xf32, #tpu.memory_space<vmem>>, vector<8x1xf32>
    %2 = vector.broadcast %1 : vector<8x1xf32> to vector<8x256xf32>
    %3 = arith.mulf %0, %2 : vector<8x256xf32>
    %c0_3 = arith.constant 0 : index
    %c0_4 = arith.constant 0 : index
    %4 = vector.load %arg4[%c0_3, %c0_4] : memref<8x256xf32, #tpu.memory_space<vmem>>, vector<8x256xf32>
    tpu.vector_store %arg4[%c0_3, %c0_4], %3 {strides = array<i32>} : memref<8x256xf32, #tpu.memory_space<vmem>>, vector<8x256xf32>,
    return
  }
  func.func @transform_0(%arg0: i32, %arg1: i32) -> (i32, i32) {
    %c0_i32 = arith.constant 0 : i32
    %c0_i32_0 = arith.constant 0 : i32
    return %arg0, %c0_i32 : i32, i32
  }
  func.func @transform_1(%arg0: i32, %arg1: i32) -> (i32, i32) {
    %c0_i32 = arith.constant 0 : i32
    return %arg0, %arg1 : i32, i32
  }
  func.func @transform_2(%arg0: i32, %arg1: i32) -> (i32, i32) {
    %c0_i32 = arith.constant 0 : i32
    return %arg0, %arg1 : i32, i32
  }
}

</mosaic_0001>

<llo_original>
// kernel: tpu_custom_call.1
$region0: #{tpu_custom_call.1}
  #allocation0 [shape = 'u32[]', space=smem, size = 0x4, offset = 0x4, fixed_abs, tag = 'smem constant byte address 0x4 - core index']
  #allocation1 [shape = 'u32[144,128]{1,0:T(1,128)}', space=vmem, size = 0x12000, scoped, tag = 'internal scratch']
  %s0 = inlined_call_operand.vmem [shape: f32[8,1], index: 0, kind: input, shape index: {}]
  %s1 = inlined_call_operand.hbm [shape: f32[8,256], index: 1, kind: input, shape index: {}]
  %s2 = inlined_call_operand.hbm [shape: f32[8,256], index: 2, kind: output, shape index: {}]
  %s3 = sld [smem:[#allocation0]]
  $region22: #{tpu_custom_call.1} parent=0
    _
  %s5 = ssub.s32 1, %s3
  %s6 = scalar_select 0, %s5, %s3
  $region1: #{tpu_custom_call.1} parent=0
    #allocation2 [shape = 'u8[8192]{0}', space=vmem, size = 0x2000, scoped, tag = 'input window, operand 1, single buffered']
    #allocation3 [shape = 's32[1]{0}', space=sflag, size = 0x4, scoped, tag = 'scoped memory for tpu_custom_call.1']
    #allocation4 [shape = 's32[1]{0}', space=sflag, size = 0x4, scoped, tag = 'scoped memory for tpu_custom_call.1']
    #allocation5 [shape = 'u8[8192]{0}', space=vmem, size = 0x2000, scoped, tag = 'output window, operand 0, single buffered']
    %7 = vsyncpa [#allocation3], 0
    %8 = vsyncpa [#allocation4], 0
    // Predicated region
    $region2: #{tpu_custom_call.1} parent=1 // pred_check
      _
    $region3: #{tpu_custom_call.1} parent=1 // pred_check_branch
      %10 = sbr.rel (0) target = $region5
    $region4: #{tpu_custom_call.1} parent=1 // pred_region
      _
    $region5: #{tpu_custom_call.1} parent=1 // pred_fallthru
      _
    // Predicated region
    $region6: #{tpu_custom_call.1} parent=1 // pred_check
      _
    $region7: #{tpu_custom_call.1} parent=1 // pred_check_branch
      %12 = sbr.rel (0) target = $region9
    $region8: #{tpu_custom_call.1} parent=1 // pred_region
      %s14 = ssub.s32 256, 256
      %15 = vsyncadd [#allocation3], %s14
      %s17 = sshll.u32 [#allocation2], 4
      %s18 = int_to_ptr.vmem [resolvable:$true] %s17
      %20 = dma.hbm_to_vmem [thread:$0]  %s1, 256, %s18, [#allocation3]
    $region9: #{tpu_custom_call.1} parent=1 // pred_fallthru
      _
    // Predicated region
    $region10: #{tpu_custom_call.1} parent=1 // pred_check
      _
    $region11: #{tpu_custom_call.1} parent=1 // pred_check_branch
      %22 = sbr.rel (0) target = $region13
    $region12: #{tpu_custom_call.1} parent=1 // pred_region
      %23 = dma.done [#allocation3], 256
    $region13: #{tpu_custom_call.1} parent=1 // pred_fallthru
      _
    %v24 = vld [vmem:[#allocation2] sm:$0xff]
    %v25 = vld [vmem:[#allocation2 + $0x8] sm:$0xff]
    %v26 = vld [vmem:[%s0] sm:$0xff]
    %28 = vset.pattern.permute.xlu0 0
    %29 = vperm.xlu0 %28, %v26
    %v30 = vpop.permute.xlu0 %29
    %v32 = vmul.f32 %v24, %v30
    %v33 = vmul.f32 %v25, %v30
    %34 = vst [vmem:[#allocation5] sm:$0xff] %v32
    %35 = vst [vmem:[#allocation5 + $0x8] sm:$0xff] %v33
    // Predicated region
    $region14: #{tpu_custom_call.1} parent=1 // pred_check
      _
    $region15: #{tpu_custom_call.1} parent=1 // pred_check_branch
      %37 = sbr.rel (0) target = $region17
    $region16: #{tpu_custom_call.1} parent=1 // pred_region
      %s39 = ssub.s32 256, 256
      %40 = vsyncadd [#allocation4], %s39
      %s42 = sshll.u32 [#allocation5], 4
      %s43 = int_to_ptr.vmem [resolvable:$true] %s42
      %45 = dma.vmem_to_hbm [thread:$0]  %s43, 256, %s2, [#allocation4]
    $region17: #{tpu_custom_call.1} parent=1 // pred_fallthru
      _
    // Predicated region
    $region18: #{tpu_custom_call.1} parent=1 // pred_check
      _
    $region19: #{tpu_custom_call.1} parent=1 // pred_check_branch
      %47 = sbr.rel (0) target = $region21
    $region20: #{tpu_custom_call.1} parent=1 // pred_region
      %48 = dma.done [#allocation4], 256
    $region21: #{tpu_custom_call.1} parent=1 // pred_fallthru
      _
    %49 = vsyncpa [#allocation3], 1
    %50 = vsyncpa [#allocation4], 1

</llo_original>
